<compile_context>
chip_gen: v7x
topology: tpu7x:2x2x1
jax: 0.10.0
libtpu: 0.0.40
codegen_flags: <defaults>
</compile_context>

<pallas_src>
import math

import jax
import jax.numpy as jnp
from jax.experimental import pallas as pl
from jax.experimental.pallas import tpu as pltpu

_TARGET_TILE_BYTES = 8 * 1024 * 1024    # per x tile; 2 bufs * (in+out) = 32 MiB
_MAX_LANE_BLOCK = 65536                 # lane-axis tile cap (multiple of 128);
                                        # keeps the (1, tc) bias buffers at 2 MiB each
_VMEM_LIMIT_BYTES = 48 * 1024 * 1024    # worst case ~36 MiB used; fits v7x 64 MiB / TC


def _add_kernel(x_ref, b_ref, o_ref):
    # x_ref: (tr, tc); b_ref: (1, tc) -> VPU broadcast along sublanes.
    o_ref[...] = x_ref[...] + b_ref[...]


def _tiled_row_add(x2, bias_row):
    """x2: (R, L); bias_row: (L,) broadcast over rows.  Tiled, pipelined add."""
    R, L = x2.shape
    itemsize = x2.dtype.itemsize
    sub = max(8, 32 // itemsize)            # native sublane packing (f32:8, bf16:16, i8:32)

    # Lane-axis tile.
    tc = L if L <= _MAX_LANE_BLOCK else _MAX_LANE_BLOCK

    # Row-axis tile.
    if R <= sub:
        tr = R                              # block == full dim is always legal
    else:
        tr = _TARGET_TILE_BYTES // (tc * itemsize)
        tr = max(sub, (min(tr, R) // sub) * sub)
        # Guarantee >= 2 row steps when possible so both v7x TensorCores stream.
        if -(-R // tr) == 1 and R >= 2 * sub:
            half = -(-R // 2)
            tr = -(-half // sub) * sub

    nr = -(-R // tr)
    nc = -(-L // tc)
    b2 = bias_row.reshape(1, L)

    cost = pl.CostEstimate(
        flops=R * L,
        transcendentals=0,
        bytes_accessed=int((2 * R * L + L) * itemsize),
    )

    return pl.pallas_call(
        _add_kernel,
        out_shape=jax.ShapeDtypeStruct((R, L), x2.dtype),
        grid=(nr, nc),
        in_specs=[
            pl.BlockSpec((tr, tc), lambda i, j: (i, j)),
            pl.BlockSpec((1, tc), lambda i, j: (0, j)),
        ],
        out_specs=pl.BlockSpec((tr, tc), lambda i, j: (i, j)),
        compiler_params=pltpu.CompilerParams(
            dimension_semantics=("parallel", "parallel"),
            vmem_limit_bytes=_VMEM_LIMIT_BYTES,
        ),
        cost_estimate=cost,
    )(x2, b2)


def _pack_factor(n_rows, n_cols, max_lanes=4096):
    """Largest g dividing n_rows with (g*n_cols) % 128 == 0 and g*n_cols <= max_lanes."""
    if n_cols % 128 == 0:
        return 1
    best = 1
    limit = min(n_rows, max(1, max_lanes // max(n_cols, 1)))
    step = 128 // math.gcd(n_cols, 128)
    for g in range(step, limit + 1, step):
        if n_rows % g == 0:
            best = g
    return best


def _lane_dense_add(x2, bias_row):
    """Route (R, L) + bias_row through a lane-dense layout whenever cheap."""
    R, L = x2.shape
    if L % 128 == 0:
        return _tiled_row_add(x2, bias_row)

    # Free packing: reshape only (no copy) when a suitable divisor of R exists.
    g = _pack_factor(R, L)
    if g > 1:
        y = _tiled_row_add(x2.reshape(R // g, g * L), jnp.tile(bias_row, g))
        return y.reshape(R, L)

    if L < 128:
        # Narrow rows with no divisor: pad a few rows so every store is a
        # full-width unmasked vst (pad/slice copies << masked-store penalty).
        step = 128 // math.gcd(L, 128)
        k = max(1, min(1024 // (step * L), R // step))
        g = step * k
        Rp = -(-R // g) * g
        xp = jnp.pad(x2, ((0, Rp - R), (0, 0)))
        y = _tiled_row_add(xp.reshape(Rp // g, g * L), jnp.tile(bias_row, g))
        return y.reshape(Rp, L)[:R]

    # L >= 128 but not a multiple of 128: only the tail lane group is masked.
    return _tiled_row_add(x2, bias_row)


def add_bias(x, bias_param):
    """AddBias.forward.  `bias_param` has shape (C, 1) like nn.Parameter(bias.unsqueeze(1))."""
    C = bias_param.shape[0]
    bias_vec = bias_param.reshape(C).astype(x.dtype)

    if x.ndim == 2:
        N, Cx = x.shape
        assert Cx == C
        return _lane_dense_add(x, bias_vec)

    if x.ndim == 4:
        N, Cx, H, W = x.shape
        assert Cx == C
        # Lane-dense flattening with a per-column bias row: column j of the
        # (N, C*H*W) view carries bias[j // (H*W)].
        x2 = x.reshape(N, C * H * W)
        bias_row = jnp.repeat(bias_vec, H * W)
        return _lane_dense_add(x2, bias_row).reshape(N, C, H, W)

    raise ValueError("AddBias supports 2-D or 4-D inputs only.")


if __name__ == "__main__":
    key = jax.random.PRNGKey(0)
    k_b, k_x4, k_x2, k_x4b = jax.random.split(key, 4)

    C = 4
    bias_vec = jax.random.normal(k_b, (C,), dtype=jnp.float32)
    bias_param = bias_vec.reshape(C, 1)   # mirrors nn.Parameter(bias.unsqueeze(1))

    # 4-D path (NCHW conv activations), lane-dense L = C*H*W = 1024.
    x4 = jax.random.normal(k_x4, (2, C, 16, 16), dtype=jnp.float32)
    y4 = jax.block_until_ready(add_bias(x4, bias_param))
    ref4 = x4 + bias_vec.reshape(1, C, 1, 1)

    # 2-D path (N, C) with tiny C -> padded lane-dense packing.
    x2 = jax.random.normal(k_x2, (8, C), dtype=jnp.float32)
    y2 = jax.block_until_ready(add_bias(x2, bias_param))
    ref2 = x2 + bias_vec.reshape(1, C)

    # 4-D path with L = C*H*W = 100 (< 128) -> packed/padded branch.
    x4b = jax.random.normal(k_x4b, (16, C, 5, 5), dtype=jnp.float32)
    y4b = jax.block_until_ready(add_bias(x4b, bias_param))
    ref4b = x4b + bias_vec.reshape(1, C, 1, 1)

    assert y4.shape == x4.shape and y4.dtype == x4.dtype
    assert y2.shape == x2.shape and y2.dtype == x2.dtype
    assert y4b.shape == x4b.shape and y4b.dtype == x4b.dtype
    assert jnp.allclose(y4, ref4, atol=1e-6), "4-D AddBias mismatch"
    assert jnp.allclose(y2, ref2, atol=1e-6), "2-D AddBias mismatch"
    assert jnp.allclose(y4b, ref4b, atol=1e-6), "4-D (small HW) AddBias mismatch"

    print("KERNEL_OK")
</pallas_src>

<mosaic_0001>
module attributes {stable_mosaic.version = 11 : i64} {
  func.func @_add_kernel(%arg0: i32, %arg1: i32, %arg2: memref<2x1024xf32, #tpu.memory_space<vmem>>, %arg3: memref<1x1024xf32, #tpu.memory_space<vmem>>, %arg4: memref<2x1024xf32, #tpu.memory_space<vmem>>) attributes {dimension_semantics = [#tpu.dimension_semantics<parallel>, #tpu.dimension_semantics<parallel>], iteration_bounds = array<i64: 1, 1>, scalar_prefetch = 0 : i64, scratch_operands = 0 : i64, tpu.core_type = #tpu.core_type<tc>, window_params = [{transform_indices = @transform_0, window_bounds = array<i64: 2, 1024>}, {transform_indices = @transform_1, window_bounds = array<i64: 1, 1024>}, {transform_indices = @transform_2, window_bounds = array<i64: 2, 1024>}]} {
    %c0 = arith.constant 0 : index
    %c0_0 = arith.constant 0 : index
    %0 = vector.load %arg2[%c0, %c0_0] : memref<2x1024xf32, #tpu.memory_space<vmem>>, vector<2x1024xf32>
    %c0_1 = arith.constant 0 : index
    %c0_2 = arith.constant 0 : index
    %1 = vector.load %arg3[%c0_1, %c0_2] : memref<1x1024xf32, #tpu.memory_space<vmem>>, vector<1x1024xf32>
    %2 = vector.broadcast %1 : vector<1x1024xf32> to vector<2x1024xf32>
    %3 = arith.addf %0, %2 : vector<2x1024xf32>
    %c0_3 = arith.constant 0 : index
    %c0_4 = arith.constant 0 : index
    %4 = vector.load %arg4[%c0_3, %c0_4] : memref<2x1024xf32, #tpu.memory_space<vmem>>, vector<2x1024xf32>
    tpu.vector_store %arg4[%c0_3, %c0_4], %3 {strides = array<i32>} : memref<2x1024xf32, #tpu.memory_space<vmem>>, vector<2x1024xf32>,
    return
  }
  func.func @transform_0(%arg0: i32, %arg1: i32) -> (i32, i32) {
    %c0_i32 = arith.constant 0 : i32
    return %arg0, %arg1 : i32, i32
  }
  func.func @transform_1(%arg0: i32, %arg1: i32) -> (i32, i32) {
    %c0_i32 = arith.constant 0 : i32
    %c0_i32_0 = arith.constant 0 : i32
    return %c0_i32, %arg1 : i32, i32
  }
  func.func @transform_2(%arg0: i32, %arg1: i32) -> (i32, i32) {
    %c0_i32 = arith.constant 0 : i32
    return %arg0, %arg1 : i32, i32
  }
}

</mosaic_0001>

<llo_original>
// kernel: tpu_custom_call.1
$region0: #{tpu_custom_call.1}
  #allocation0 [shape = 'u32[]', space=smem, size = 0x4, offset = 0x4, fixed_abs, tag = 'smem constant byte address 0x4 - core index']
  #allocation1 [shape = 'u32[144,128]{1,0:T(1,128)}', space=vmem, size = 0x12000, scoped, tag = 'internal scratch']
  %s0 = inlined_call_operand.hbm [shape: f32[2,1024], index: 0, kind: input, shape index: {}]
  %s1 = inlined_call_operand.hbm [shape: f32[1,1024], index: 1, kind: input, shape index: {}]
  %s2 = inlined_call_operand.hbm [shape: f32[2,1024], index: 2, kind: output, shape index: {}]
  %s3 = sld [smem:[#allocation0]]
  $region26: #{tpu_custom_call.1} parent=0
    _
  %s5 = ssub.s32 1, %s3
  %s6 = scalar_select 0, %s5, %s3
  $region1: #{tpu_custom_call.1} parent=0
    #allocation2 [shape = 'u8[8192]{0}', space=vmem, size = 0x2000, scoped, tag = 'input window, operand 0, single buffered']
    #allocation3 [shape = 's32[1]{0}', space=sflag, size = 0x4, scoped, tag = 'scoped memory for tpu_custom_call.1']
    #allocation4 [shape = 's32[1]{0}', space=sflag, size = 0x4, scoped, tag = 'scoped memory for tpu_custom_call.1']
    #allocation5 [shape = 'u8[4096]{0}', space=vmem, size = 0x1000, scoped, tag = 'input window, operand 1, single buffered']
    #allocation6 [shape = 's32[1]{0}', space=sflag, size = 0x4, scoped, tag = 'scoped memory for tpu_custom_call.1']
    #allocation7 [shape = 'u8[8192]{0}', space=vmem, size = 0x2000, scoped, tag = 'output window, operand 0, single buffered']
    %7 = vsyncpa [#allocation3], 0
    %8 = vsyncpa [#allocation6], 0
    %9 = vsyncpa [#allocation4], 0
    // Predicated region
    $region2: #{tpu_custom_call.1} parent=1 // pred_check
      _
    $region3: #{tpu_custom_call.1} parent=1 // pred_check_branch
      %11 = sbr.rel (0) target = $region5
    $region4: #{tpu_custom_call.1} parent=1 // pred_region
      %s13 = ssub.s32 256, 256
      %14 = vsyncadd [#allocation3], %s13
      %s16 = sshll.u32 [#allocation2], 4
      %s17 = int_to_ptr.vmem [resolvable:$true] %s16
      %19 = dma.hbm_to_vmem [thread:$0]  %s0, 256, %s17, [#allocation3]
    $region5: #{tpu_custom_call.1} parent=1 // pred_fallthru
      _
    // Predicated region
    $region6: #{tpu_custom_call.1} parent=1 // pred_check
      _
    $region7: #{tpu_custom_call.1} parent=1 // pred_check_branch
      %21 = sbr.rel (0) target = $region9
    $region8: #{tpu_custom_call.1} parent=1 // pred_region
      %s23 = ssub.s32 128, 128
      %24 = vsyncadd [#allocation6], %s23
      %s26 = sshll.u32 [#allocation5], 4
      %s27 = int_to_ptr.vmem [resolvable:$true] %s26
      %29 = dma.hbm_to_vmem [thread:$0]  %s1, 128, %s27, [#allocation6]
    $region9: #{tpu_custom_call.1} parent=1 // pred_fallthru
      _
    // Predicated region
    $region10: #{tpu_custom_call.1} parent=1 // pred_check
      _
    $region11: #{tpu_custom_call.1} parent=1 // pred_check_branch
      %31 = sbr.rel (0) target = $region13
    $region12: #{tpu_custom_call.1} parent=1 // pred_region
      %32 = dma.done [#allocation3], 256
    $region13: #{tpu_custom_call.1} parent=1 // pred_fallthru
      _
    // Predicated region
    $region14: #{tpu_custom_call.1} parent=1 // pred_check
      _
    $region15: #{tpu_custom_call.1} parent=1 // pred_check_branch
      %34 = sbr.rel (0) target = $region17
    $region16: #{tpu_custom_call.1} parent=1 // pred_region
      %35 = dma.done [#allocation6], 128
    $region17: #{tpu_custom_call.1} parent=1 // pred_fallthru
      _
    %v36 = vld [vmem:[#allocation2] sm:$0xff]
    %v37 = vld [vmem:[#allocation2 + $0x8] sm:$0xff]
    %v38 = vld [vmem:[#allocation5] sm:$0xff]
    %v40 = vlaneseq
    %v41 = vshrl.u32 %v40, 7
    %v42 = vsub.s32 0, %v41
    %v43 = vrot.slane %v38, %v42
    %v44 = vlaneseq
    %v45 = vshrl.u32 %v44, 7
    %v46 = vsub.s32 1, %v45
    %v47 = vrot.slane %v38, %v46
    %v48 = vlaneseq
    %v49 = vshrl.u32 %v48, 7
    %v50 = vsub.s32 2, %v49
    %v51 = vrot.slane %v38, %v50
    %v52 = vlaneseq
    %v53 = vshrl.u32 %v52, 7
    %v54 = vsub.s32 3, %v53
    %v55 = vrot.slane %v38, %v54
    %v56 = vlaneseq
    %v57 = vshrl.u32 %v56, 7
    %v58 = vsub.s32 4, %v57
    %v59 = vrot.slane %v38, %v58
    %v60 = vlaneseq
    %v61 = vshrl.u32 %v60, 7
    %v62 = vsub.s32 5, %v61
    %v63 = vrot.slane %v38, %v62
    %v64 = vlaneseq
    %v65 = vshrl.u32 %v64, 7
    %v66 = vsub.s32 6, %v65
    %v67 = vrot.slane %v38, %v66
    %v68 = vlaneseq
    %v69 = vshrl.u32 %v68, 7
    %v70 = vsub.s32 7, %v69
    %v71 = vrot.slane %v38, %v70
    %v72 = vcombine.low %v43, %v47
    %v73 = vcombine.low %v51, %v55
    %v75 = vunpack.c.l.s4 1983009808
    %v76 = vunpack.c.0.s8 %v75
    %v77 = vlaneseq
    %v78 = vshrl.u32 %v77, 7
    %v79 = vsub.s32 %v76, %v78
    %v80 = vrot.slane %v72, %v79
    %v82 = vunpack.c.l.s4 1983009808
    %v83 = vunpack.c.0.s8 %v82
    %v84 = vlaneseq
    %v85 = vshrl.u32 %v84, 7
    %v86 = vsub.s32 %v83, %v85
    %v87 = vrot.slane %v73, %v86
    %v88 = vcombine.low %v80, %v87
    %v89 = vcombine.low %v59, %v63
    %v90 = vcombine.low %v67, %v71
    %v92 = vunpack.c.l.s4 1983009808
    %v93 = vunpack.c.0.s8 %v92
    %v94 = vlaneseq
    %v95 = vshrl.u32 %v94, 7
    %v96 = vsub.s32 %v93, %v95
    %v97 = vrot.slane %v89, %v96
    %v99 = vunpack.c.l.s4 1983009808
    %v100 = vunpack.c.0.s8 %v99
    %v101 = vlaneseq
    %v102 = vshrl.u32 %v101, 7
    %v103 = vsub.s32 %v100, %v102
    %v104 = vrot.slane %v90, %v103
    %v105 = vcombine.low %v97, %v104
    %v108 = vadd.f32 %v36, %v88
    %v109 = vadd.f32 %v37, %v105
    %110 = vst [vmem:[#allocation7] sm:$0xff] %v108
    %111 = vst [vmem:[#allocation7 + $0x8] sm:$0xff] %v109
    // Predicated region
    $region18: #{tpu_custom_call.1} parent=1 // pred_check
      _
    $region19: #{tpu_custom_call.1} parent=1 // pred_check_branch
      %113 = sbr.rel (0) target = $region21
    $region20: #{tpu_custom_call.1} parent=1 // pred_region
      %s115 = ssub.s32 256, 256
      %116 = vsyncadd [#allocation4], %s115
      %s118 = sshll.u32 [#allocation7], 4
      %s119 = int_to_ptr.vmem [resolvable:$true] %s118
      %121 = dma.vmem_to_hbm [thread:$0]  %s119, 256, %s2, [#allocation4]
    $region21: #{tpu_custom_call.1} parent=1 // pred_fallthru
      _
    // Predicated region
    $region22: #{tpu_custom_call.1} parent=1 // pred_check
      _
    $region23: #{tpu_custom_call.1} parent=1 // pred_check_branch
      %123 = sbr.rel (0) target = $region25
    $region24: #{tpu_custom_call.1} parent=1 // pred_region
      %124 = dma.done [#allocation4], 256
    $region25: #{tpu_custom_call.1} parent=1 // pred_fallthru
      _
    %125 = vsyncpa [#allocation3], 1
    %126 = vsyncpa [#allocation6], 1
    %127 = vsyncpa [#allocation4], 1

</llo_original>
